<compile_context>
chip_gen: v7x
topology: tpu7x:2x2x1
jax: 0.10.0
libtpu: 0.0.40
codegen_flags: <defaults>
</compile_context>

<pallas_src>
import functools
import numpy as np

import jax
import jax.numpy as jnp
from jax.experimental import pallas as pl
from jax.experimental.pallas import tpu as pltpu


# ------------------------- parameter setup (host glue) ----------------------

def gaussian_1d(window_size: int, sigma: float) -> np.ndarray:
    x = np.arange(window_size, dtype=np.float64)
    g = np.exp(-((x - window_size // 2) ** 2) / float(2 * sigma ** 2))
    return (g / g.sum()).astype(np.float32)


def compute_zero_padding(kernel_size):
    return tuple((k - 1) // 2 for k in kernel_size)   # (pad_h, pad_w)


def band_matrix(n_out: int, n_in: int, taps: np.ndarray, pad: int) -> np.ndarray:
    """A[i, j] = taps[j - i + pad]; zeros outside the band encode zero padding."""
    A = np.zeros((n_out, n_in), np.float32)
    for i in range(n_out):
        for d, w in enumerate(taps):
            j = i + d - pad
            if 0 <= j < n_in:
                A[i, j] = float(w)
    return A


def _pick_plane_batch(n_planes: int, plane_bytes: int,
                      budget_bytes: int = 2 << 20, max_nb: int = 32) -> int:
    """Largest divisor of n_planes whose block fits a ~2 MiB budget, keeping grid >= 2."""
    cap = max(1, min(n_planes, max_nb, budget_bytes // max(plane_bytes, 1)))
    if n_planes >= 2:
        cap = min(cap, max(1, n_planes // 2))   # keep >= 2 grid steps (v7x megacore)
    for d in range(cap, 0, -1):
        if n_planes % d == 0:
            return d
    return 1


# ------------------------------ Pallas kernel -------------------------------

def _blur_kernel(av_ref, awt_ref, x_ref, o_ref, *, nb):
    """One grid step blurs nb planes via two small MXU matmuls per plane.

    av_ref : (Ho, H)  f32 banded vertical-pass matrix (constant across grid).
    awt_ref: (W,  Wo) f32 banded horizontal-pass matrix, pre-transposed.
    x_ref  : (nb, H, W)  input planes (unpadded).
    o_ref  : (nb, Ho, Wo) output planes.
    """
    av = av_ref[...]      # resident: constant index_map
    awt = awt_ref[...]
    for n in range(nb):   # nb is a small compile-time constant -> static unroll
        xn = x_ref[n].astype(jnp.float32)                              # (H, W)
        tmp = jnp.dot(av, xn, preferred_element_type=jnp.float32)      # (Ho, W)
        on = jnp.dot(tmp, awt, preferred_element_type=jnp.float32)     # (Ho, Wo)
        o_ref[n] = on.astype(o_ref.dtype)


def gaussian_blur(x, kernel_size=(3, 3), sigma=(1.5, 1.5)):
    """x: (B, C, H, W). Returns blurred (B, C, Ho, Wo), same dtype as x."""
    assert x.ndim == 4, "expected BxCxHxW"
    B, C, H, W = x.shape
    kx, ky = kernel_size
    pad_h, pad_w = compute_zero_padding(kernel_size)

    # Output spatial dims (general formula; equals H, W for odd kernels).
    Ho = H + 2 * pad_h - kx + 1
    Wo = W + 2 * pad_w - ky + 1

    # Separable Gaussian taps -> banded matrices (zero padding built in).
    k_v = gaussian_1d(kx, sigma[0])   # taps along H
    k_h = gaussian_1d(ky, sigma[1])   # taps along W
    av = jnp.asarray(band_matrix(Ho, H, k_v, pad_h))         # (Ho, H)
    awt = jnp.asarray(band_matrix(Wo, W, k_h, pad_w).T)      # (W, Wo)

    N = B * C
    xr = x.reshape(N, H, W)                                  # free reshape, no pad pass
    itemsize = int(np.dtype(x.dtype).itemsize)
    nb = _pick_plane_batch(N, H * W * itemsize)
    grid = (N // nb,)

    # VMEM budget: double-buffered in/out blocks + resident band matrices + tmp.
    in_blk = nb * H * W * itemsize
    out_blk = nb * Ho * Wo * itemsize
    const_b = (Ho * H + W * Wo) * 4
    vmem_est = 2 * (in_blk + out_blk) + 2 * const_b + nb * Ho * W * 4 + (4 << 20)
    vmem_limit = int(min(max(32 << 20, vmem_est), 48 << 20))

    cost = pl.CostEstimate(
        flops=2 * N * (Ho * H * W + Ho * W * Wo),
        transcendentals=0,
        bytes_accessed=(N * H * W + N * Ho * Wo) * itemsize + const_b,
    )

    kernel = functools.partial(_blur_kernel, nb=nb)

    out = pl.pallas_call(
        kernel,
        out_shape=jax.ShapeDtypeStruct((N, Ho, Wo), x.dtype),
        grid_spec=pltpu.PrefetchScalarGridSpec(
            num_scalar_prefetch=0,
            grid=grid,
            in_specs=[
                pl.BlockSpec((Ho, H), lambda i: (0, 0)),       # A_v (resident)
                pl.BlockSpec((W, Wo), lambda i: (0, 0)),       # A_w^T (resident)
                pl.BlockSpec((nb, H, W), lambda i: (i, 0, 0)),  # nb input planes
            ],
            out_specs=pl.BlockSpec((nb, Ho, Wo), lambda i: (i, 0, 0)),
        ),
        compiler_params=pltpu.CompilerParams(
            dimension_semantics=("parallel",),
            vmem_limit_bytes=vmem_limit,
        ),
        cost_estimate=cost,
    )(av, awt, xr)

    return out.reshape(B, C, Ho, Wo)


# ----------------------------- reference check -----------------------------

def gaussian_blur_ref_np(x_np, kernel_size=(3, 3), sigma=(1.5, 1.5)):
    """Exact float64 zero-padded depthwise conv (matches torch conv2d semantics)."""
    kx, ky = kernel_size
    pad_h, pad_w = compute_zero_padding(kernel_size)
    k2d = np.outer(gaussian_1d(kx, sigma[0]),
                   gaussian_1d(ky, sigma[1])).astype(np.float64)
    B, C, H, W = x_np.shape
    Ho = H + 2 * pad_h - kx + 1
    Wo = W + 2 * pad_w - ky + 1
    xp = np.pad(x_np.astype(np.float64),
                ((0, 0), (0, 0), (pad_h, pad_h), (pad_w, pad_w)))
    out = np.zeros((B, C, Ho, Wo), np.float64)
    for di in range(kx):
        for dj in range(ky):
            out += k2d[di, dj] * xp[:, :, di:di + Ho, dj:dj + Wo]
    return out


if __name__ == "__main__":
    key = jax.random.PRNGKey(0)
    B, C, H, W = 2, 4, 16, 16
    x = jax.random.normal(key, (B, C, H, W), dtype=jnp.float32)

    out = gaussian_blur(x, kernel_size=(3, 3), sigma=(1.5, 1.5))
    out = jax.block_until_ready(out)
    assert out.shape == (B, C, H, W)

    ref = gaussian_blur_ref_np(np.asarray(x), (3, 3), (1.5, 1.5))
    np.testing.assert_allclose(np.asarray(out, np.float64), ref,
                               rtol=1e-3, atol=1e-3)
    print("KERNEL_OK")
</pallas_src>

<mosaic_0001>
module attributes {stable_mosaic.version = 11 : i64} {
  func.func @_blur_kernel(%arg0: i32, %arg1: memref<16x16xf32, #tpu.memory_space<vmem>>, %arg2: memref<16x16xf32, #tpu.memory_space<vmem>>, %arg3: memref<4x16x16xf32, #tpu.memory_space<vmem>>, %arg4: memref<4x16x16xf32, #tpu.memory_space<vmem>>) attributes {dimension_semantics = [#tpu.dimension_semantics<parallel>], iteration_bounds = array<i64: 2>, scalar_prefetch = 0 : i64, scratch_operands = 0 : i64, tpu.core_type = #tpu.core_type<tc>, window_params = [{pipeline_mode = #tpu.pipeline_mode<synchronous>, transform_indices = @transform_0, window_bounds = array<i64: 16, 16>}, {pipeline_mode = #tpu.pipeline_mode<synchronous>, transform_indices = @transform_1, window_bounds = array<i64: 16, 16>}, {transform_indices = @transform_2, window_bounds = array<i64: 4, 16, 16>}, {transform_indices = @transform_3, window_bounds = array<i64: 4, 16, 16>}]} {
    %c0 = arith.constant 0 : index
    %c0_0 = arith.constant 0 : index
    %0 = vector.load %arg1[%c0, %c0_0] : memref<16x16xf32, #tpu.memory_space<vmem>>, vector<16x16xf32>
    %c0_1 = arith.constant 0 : index
    %c0_2 = arith.constant 0 : index
    %1 = vector.load %arg2[%c0_1, %c0_2] : memref<16x16xf32, #tpu.memory_space<vmem>>, vector<16x16xf32>
    %c0_3 = arith.constant 0 : index
    %c0_4 = arith.constant 0 : index
    %c0_5 = arith.constant 0 : index
    %2 = vector.load %arg3[%c0_3, %c0_4, %c0_5] : memref<4x16x16xf32, #tpu.memory_space<vmem>>, vector<1x16x16xf32>
    %3 = vector.shape_cast %2 : vector<1x16x16xf32> to vector<16x16xf32>
    %cst = arith.constant dense<0.000000e+00> : vector<16x16xf32>
    %4 = tpu.matmul %0, %3, %cst {dimension_numbers = #tpu.dot_dimension_numbers<[1], [0], [0], [1], [0, 0, 1, 1], [], []>} : vector<16x16xf32>, vector<16x16xf32>, vector<16x16xf32> -> vector<16x16xf32>
    %cst_6 = arith.constant dense<0.000000e+00> : vector<16x16xf32>
    %5 = tpu.matmul %4, %1, %cst_6 {dimension_numbers = #tpu.dot_dimension_numbers<[1], [0], [0], [1], [0, 0, 1, 1], [], []>} : vector<16x16xf32>, vector<16x16xf32>, vector<16x16xf32> -> vector<16x16xf32>
    %c0_7 = arith.constant 0 : index
    %c0_8 = arith.constant 0 : index
    %c0_9 = arith.constant 0 : index
    %6 = vector.load %arg4[%c0_7, %c0_8, %c0_9] : memref<4x16x16xf32, #tpu.memory_space<vmem>>, vector<1x16x16xf32>
    %7 = vector.shape_cast %6 : vector<1x16x16xf32> to vector<16x16xf32>
    %8 = vector.shape_cast %5 : vector<16x16xf32> to vector<1x16x16xf32>
    tpu.vector_store %arg4[%c0_7, %c0_8, %c0_9], %8 {strides = array<i32>} : memref<4x16x16xf32, #tpu.memory_space<vmem>>, vector<1x16x16xf32>,
    %c1 = arith.constant 1 : index
    %c0_10 = arith.constant 0 : index
    %c0_11 = arith.constant 0 : index
    %9 = vector.load %arg3[%c1, %c0_10, %c0_11] : memref<4x16x16xf32, #tpu.memory_space<vmem>>, vector<1x16x16xf32>
    %10 = vector.shape_cast %9 : vector<1x16x16xf32> to vector<16x16xf32>
    %cst_12 = arith.constant dense<0.000000e+00> : vector<16x16xf32>
    %11 = tpu.matmul %0, %10, %cst_12 {dimension_numbers = #tpu.dot_dimension_numbers<[1], [0], [0], [1], [0, 0, 1, 1], [], []>} : vector<16x16xf32>, vector<16x16xf32>, vector<16x16xf32> -> vector<16x16xf32>
    %cst_13 = arith.constant dense<0.000000e+00> : vector<16x16xf32>
    %12 = tpu.matmul %11, %1, %cst_13 {dimension_numbers = #tpu.dot_dimension_numbers<[1], [0], [0], [1], [0, 0, 1, 1], [], []>} : vector<16x16xf32>, vector<16x16xf32>, vector<16x16xf32> -> vector<16x16xf32>
    %c1_14 = arith.constant 1 : index
    %c0_15 = arith.constant 0 : index
    %c0_16 = arith.constant 0 : index
    %13 = vector.load %arg4[%c1_14, %c0_15, %c0_16] : memref<4x16x16xf32, #tpu.memory_space<vmem>>, vector<1x16x16xf32>
    %14 = vector.shape_cast %13 : vector<1x16x16xf32> to vector<16x16xf32>
    %15 = vector.shape_cast %12 : vector<16x16xf32> to vector<1x16x16xf32>
    tpu.vector_store %arg4[%c1_14, %c0_15, %c0_16], %15 {strides = array<i32>} : memref<4x16x16xf32, #tpu.memory_space<vmem>>, vector<1x16x16xf32>,
    %c2 = arith.constant 2 : index
    %c0_17 = arith.constant 0 : index
    %c0_18 = arith.constant 0 : index
    %16 = vector.load %arg3[%c2, %c0_17, %c0_18] : memref<4x16x16xf32, #tpu.memory_space<vmem>>, vector<1x16x16xf32>
    %17 = vector.shape_cast %16 : vector<1x16x16xf32> to vector<16x16xf32>
    %cst_19 = arith.constant dense<0.000000e+00> : vector<16x16xf32>
    %18 = tpu.matmul %0, %17, %cst_19 {dimension_numbers = #tpu.dot_dimension_numbers<[1], [0], [0], [1], [0, 0, 1, 1], [], []>} : vector<16x16xf32>, vector<16x16xf32>, vector<16x16xf32> -> vector<16x16xf32>
    %cst_20 = arith.constant dense<0.000000e+00> : vector<16x16xf32>
    %19 = tpu.matmul %18, %1, %cst_20 {dimension_numbers = #tpu.dot_dimension_numbers<[1], [0], [0], [1], [0, 0, 1, 1], [], []>} : vector<16x16xf32>, vector<16x16xf32>, vector<16x16xf32> -> vector<16x16xf32>
    %c2_21 = arith.constant 2 : index
    %c0_22 = arith.constant 0 : index
    %c0_23 = arith.constant 0 : index
    %20 = vector.load %arg4[%c2_21, %c0_22, %c0_23] : memref<4x16x16xf32, #tpu.memory_space<vmem>>, vector<1x16x16xf32>
    %21 = vector.shape_cast %20 : vector<1x16x16xf32> to vector<16x16xf32>
    %22 = vector.shape_cast %19 : vector<16x16xf32> to vector<1x16x16xf32>
    tpu.vector_store %arg4[%c2_21, %c0_22, %c0_23], %22 {strides = array<i32>} : memref<4x16x16xf32, #tpu.memory_space<vmem>>, vector<1x16x16xf32>,
    %c3 = arith.constant 3 : index
    %c0_24 = arith.constant 0 : index
    %c0_25 = arith.constant 0 : index
    %23 = vector.load %arg3[%c3, %c0_24, %c0_25] : memref<4x16x16xf32, #tpu.memory_space<vmem>>, vector<1x16x16xf32>
    %24 = vector.shape_cast %23 : vector<1x16x16xf32> to vector<16x16xf32>
    %cst_26 = arith.constant dense<0.000000e+00> : vector<16x16xf32>
    %25 = tpu.matmul %0, %24, %cst_26 {dimension_numbers = #tpu.dot_dimension_numbers<[1], [0], [0], [1], [0, 0, 1, 1], [], []>} : vector<16x16xf32>, vector<16x16xf32>, vector<16x16xf32> -> vector<16x16xf32>
    %cst_27 = arith.constant dense<0.000000e+00> : vector<16x16xf32>
    %26 = tpu.matmul %25, %1, %cst_27 {dimension_numbers = #tpu.dot_dimension_numbers<[1], [0], [0], [1], [0, 0, 1, 1], [], []>} : vector<16x16xf32>, vector<16x16xf32>, vector<16x16xf32> -> vector<16x16xf32>
    %c3_28 = arith.constant 3 : index
    %c0_29 = arith.constant 0 : index
    %c0_30 = arith.constant 0 : index
    %27 = vector.load %arg4[%c3_28, %c0_29, %c0_30] : memref<4x16x16xf32, #tpu.memory_space<vmem>>, vector<1x16x16xf32>
    %28 = vector.shape_cast %27 : vector<1x16x16xf32> to vector<16x16xf32>
    %29 = vector.shape_cast %26 : vector<16x16xf32> to vector<1x16x16xf32>
    tpu.vector_store %arg4[%c3_28, %c0_29, %c0_30], %29 {strides = array<i32>} : memref<4x16x16xf32, #tpu.memory_space<vmem>>, vector<1x16x16xf32>,
    return
  }
  func.func @transform_0(%arg0: i32) -> (i32, i32) {
    %c0_i32 = arith.constant 0 : i32
    %c0_i32_0 = arith.constant 0 : i32
    %c0_i32_1 = arith.constant 0 : i32
    return %c0_i32, %c0_i32_0 : i32, i32
  }
  func.func @transform_1(%arg0: i32) -> (i32, i32) {
    %c0_i32 = arith.constant 0 : i32
    %c0_i32_0 = arith.constant 0 : i32
    %c0_i32_1 = arith.constant 0 : i32
    return %c0_i32, %c0_i32_0 : i32, i32
  }
  func.func @transform_2(%arg0: i32) -> (i32, i32, i32) {
    %c0_i32 = arith.constant 0 : i32
    %c0_i32_0 = arith.constant 0 : i32
    %c0_i32_1 = arith.constant 0 : i32
    return %arg0, %c0_i32, %c0_i32_0 : i32, i32, i32
  }
  func.func @transform_3(%arg0: i32) -> (i32, i32, i32) {
    %c0_i32 = arith.constant 0 : i32
    %c0_i32_0 = arith.constant 0 : i32
    %c0_i32_1 = arith.constant 0 : i32
    return %arg0, %c0_i32, %c0_i32_0 : i32, i32, i32
  }
}

</mosaic_0001>

<llo_original>
// kernel: tpu_custom_call.1
$region0: #{tpu_custom_call.1}
  #allocation0 [shape = 'u32[]', space=smem, size = 0x4, offset = 0x4, fixed_abs, tag = 'smem constant byte address 0x4 - core index']
  #allocation1 [shape = 'u32[144,128]{1,0:T(1,128)}', space=vmem, size = 0x12000, scoped, tag = 'internal scratch']
  %s0 = inlined_call_operand.hbm [shape: f32[16,16], index: 0, kind: input, shape index: {}]
  %s1 = inlined_call_operand.hbm [shape: f32[16,16], index: 1, kind: input, shape index: {}]
  %s2 = inlined_call_operand.hbm [shape: f32[8,16,16], index: 2, kind: input, shape index: {}]
  %s3 = inlined_call_operand.hbm [shape: f32[8,16,16], index: 3, kind: output, shape index: {}]
  %s4 = sld [smem:[#allocation0]]
  $region57: #{tpu_custom_call.1} parent=0
    _
  %s6 = ssub.s32 1, %s4
  %s7 = scalar_select 0, %s6, %s4
  $region1: #{tpu_custom_call.1} parent=0
    #allocation2 [shape = 'u8[8192]{0}', space=vmem, size = 0x2000, scoped, tag = 'input window, operand 0, single buffered']
    #allocation3 [shape = 's32[2]{0}', space=sflag, size = 0x8, scoped, tag = 'scoped memory for tpu_custom_call.1']
    #allocation4 [shape = 's32[2]{0}', space=sflag, size = 0x8, scoped, tag = 'scoped memory for tpu_custom_call.1']
    #allocation5 [shape = 'u8[8192]{0}', space=vmem, size = 0x2000, scoped, tag = 'input window, operand 1, single buffered']
    #allocation6 [shape = 's32[1]{0}', space=sflag, size = 0x4, scoped, tag = 'scoped memory for tpu_custom_call.1']
    #allocation7 [shape = 'u8[65536]{0}', space=vmem, size = 0x10000, scoped, tag = 'input window, operand 2']
    #allocation8 [shape = 'u8[65536]{0}', space=vmem, size = 0x10000, scoped, tag = 'output window, operand 0']
    %8 = vsyncpa [#allocation3], 0
    %9 = vsyncpa [#allocation6], 0
    %10 = vsyncpa [#allocation4], 0
    %s11 = scalar_lea.sflag [#allocation4], 1
    %12 = vsyncpa %s11, 0
    loop: start=0, step=1, limit=4
    $region2: #{tpu_custom_call.1} parent=1 // loop_pre_header
      _
    $region3: #{tpu_custom_call.1} parent=1 // loop_header
      %s14 = sphi 0, %s18
      %p15 = scmp.ge.s32.totalorder %s14, 4
      %s22 = sphi 0, %s22
      %s24 = sphi 0, %s22
      %s25 = sphi 0, %s24
      %s39 = sphi 0, %s25
      %s43 = sphi 0, %s43
      %s45 = sphi 0, %s43
      %s46 = sphi 0, %s45
      %s60 = sphi 0, %s46
      %s66 = sphi 0, %s68
      %s69 = sphi 0, %s66
      %s70 = sphi 0, %s69
      %s86 = sphi 0, %s70
      %s92 = sphi 0, %s94
      %s95 = sphi 0, %s92
      %s96 = sphi 0, %s95
      %s112 = sphi 0, %s96
    $region4: #{tpu_custom_call.1} parent=1 // loop_header_branch
      %17 = sbr.rel (%p15) target = $region8
    $region5: #{tpu_custom_call.1} parent=1 // loop_body
      %s19 = ssub.s32 %s14, 1
      %s20 = ssub.s32 %s14, 2
      %s21 = sadd.s32 %s14, 1
      %s23 = sadd.s32 %s22, 1
      %p26 = scmp.eq.s32.totalorder %s14, 1
      %p27 = scmp.ne.s32.totalorder %s22, %s24
      %p28 = scmp.eq.s32.totalorder %s14, 0
      %p29 = por %p27, %p28
      %p30 = scmp.ne.s32.totalorder %s22, %s24
      %p31 = scmp.eq.s32.totalorder %s19, 1
      %p32 = por %p30, %p31
      %p33 = scmp.ne.s32.totalorder %s24, %s25
      %p34 = scmp.eq.s32.totalorder %s19, 0
      %p35 = por %p33, %p34
      %p36 = scmp.ne.s32.totalorder %s24, %s25
      %p37 = scmp.eq.s32.totalorder %s20, 1
      %p38 = por %p36, %p37
      %p40 = scmp.ne.s32.totalorder %s25, %s39
      %p41 = scmp.eq.s32.totalorder %s20, 0
      %p42 = por %p40, %p41
      %s44 = sadd.s32 %s43, 1
      %p47 = scmp.eq.s32.totalorder %s14, 1
      %p48 = scmp.ne.s32.totalorder %s43, %s45
      %p49 = scmp.eq.s32.totalorder %s14, 0
      %p50 = por %p48, %p49
      %p51 = scmp.ne.s32.totalorder %s43, %s45
      %p52 = scmp.eq.s32.totalorder %s19, 1
      %p53 = por %p51, %p52
      %p54 = scmp.ne.s32.totalorder %s45, %s46
      %p55 = scmp.eq.s32.totalorder %s19, 0
      %p56 = por %p54, %p55
      %p57 = scmp.ne.s32.totalorder %s45, %s46
      %p58 = scmp.eq.s32.totalorder %s20, 1
      %p59 = por %p57, %p58
      %p61 = scmp.ne.s32.totalorder %s46, %s60
      %p62 = scmp.eq.s32.totalorder %s20, 0
      %p63 = por %p61, %p62
      %s64 = ssub.s32 %s14, %s21
      %p65 = scmp.eq.s32.totalorder %s64, 0
      %s67 = sadd.s32 %s66, 1
      %s68 = scalar_select %p65, %s66, %s67
      %p71 = pneg %p65
      %p72 = scmp.eq.s32.totalorder %s14, 1
      %p73 = por %p71, %p72
      %p74 = scmp.ne.s32.totalorder %s66, %s69
      %p75 = scmp.eq.s32.totalorder %s14, 0
      %p76 = por %p74, %p75
      %p77 = scmp.ne.s32.totalorder %s66, %s69
      %p78 = scmp.eq.s32.totalorder %s19, 1
      %p79 = por %p77, %p78
      %p80 = scmp.ne.s32.totalorder %s69, %s70
      %p81 = scmp.eq.s32.totalorder %s19, 0
      %p82 = por %p80, %p81
      %p83 = scmp.ne.s32.totalorder %s69, %s70
      %p84 = scmp.eq.s32.totalorder %s20, 1
      %p85 = por %p83, %p84
      %p87 = scmp.ne.s32.totalorder %s70, %s86
      %p88 = scmp.eq.s32.totalorder %s20, 0
      %p89 = por %p87, %p88
      %s90 = ssub.s32 %s14, %s21
      %p91 = scmp.eq.s32.totalorder %s90, 0
      %s93 = sadd.s32 %s92, 1
      %s94 = scalar_select %p91, %s92, %s93
      %p97 = pneg %p91
      %p98 = scmp.eq.s32.totalorder %s14, 1
      %p99 = por %p97, %p98
      %p100 = scmp.ne.s32.totalorder %s92, %s95
      %p101 = scmp.eq.s32.totalorder %s14, 0
      %p102 = por %p100, %p101
      %p103 = scmp.ne.s32.totalorder %s92, %s95
      %p104 = scmp.eq.s32.totalorder %s19, 1
      %p105 = por %p103, %p104
      %p106 = scmp.ne.s32.totalorder %s95, %s96
      %p107 = scmp.eq.s32.totalorder %s19, 0
      %p108 = por %p106, %p107
      %p109 = scmp.ne.s32.totalorder %s95, %s96
      %p110 = scmp.eq.s32.totalorder %s20, 1
      %p111 = por %p109, %p110
      %p113 = scmp.ne.s32.totalorder %s96, %s112
      %p114 = scmp.eq.s32.totalorder %s20, 0
      %p115 = por %p113, %p114
      %p116 = scmp.le.s32.totalorder 1, %s14
      %p117 = scmp.lt.s32.totalorder %s14, 3
      %p118 = pnand %p116, %p117
      %p119 = pneg %p118
      // Predicated region
      $region9: #{tpu_custom_call.1} parent=5 // pred_check
        _
      $region10: #{tpu_custom_call.1} parent=5 // pred_check_branch
        %121 = sbr.rel (%p118) target = $region12
      $region11: #{tpu_custom_call.1} parent=5 // pred_region
        %s122 = ssub.s32 %s14, 1
        // Predicated region
        $region13: #{tpu_custom_call.1} parent=11 // pred_check
          %p123 = pneg %p35
        $region14: #{tpu_custom_call.1} parent=11 // pred_check_branch
          %125 = sbr.rel (%p123) target = $region16
        $region15: #{tpu_custom_call.1} parent=11 // pred_region
          %s127 = ssub.s32 256, 256
          %128 = vsyncadd [#allocation3], %s127
          %s129 = sshll.u32 [#allocation2], 4
          %s130 = int_to_ptr.vmem [resolvable:$true] %s129
          %135 = dma.hbm_to_vmem [thread:$0]  %s0, 256, %s130, [#allocation3], 128, 128, 8
        $region16: #{tpu_custom_call.1} parent=11 // pred_fallthru
          _
        // Predicated region
        $region17: #{tpu_custom_call.1} parent=11 // pred_check
          %p136 = pneg %p56
        $region18: #{tpu_custom_call.1} parent=11 // pred_check_branch
          %138 = sbr.rel (%p136) target = $region20
        $region19: #{tpu_custom_call.1} parent=11 // pred_region
          %s140 = ssub.s32 256, 256
          %141 = vsyncadd [#allocation6], %s140
          %s142 = sshll.u32 [#allocation5], 4
          %s143 = int_to_ptr.vmem [resolvable:$true] %s142
          %148 = dma.hbm_to_vmem [thread:$0]  %s1, 256, %s143, [#allocation6], 128, 128, 8
        $region20: #{tpu_custom_call.1} parent=11 // pred_fallthru
          _
      $region12: #{tpu_custom_call.1} parent=5 // pred_fallthru
        _
      %p149 = scmp.lt.s32.totalorder %s14, 2
      // Predicated region
      $region21: #{tpu_custom_call.1} parent=5 // pred_check
        %p150 = pneg %p149
      $region22: #{tpu_custom_call.1} parent=5 // pred_check_branch
        %152 = sbr.rel (%p150) target = $region24
      $region23: #{tpu_custom_call.1} parent=5 // pred_region
        // Predicated region
        $region25: #{tpu_custom_call.1} parent=23 // pred_check
          %p153 = pneg %p76
        $region26: #{tpu_custom_call.1} parent=23 // pred_check_branch
          %155 = sbr.rel (%p153) target = $region28
        $region27: #{tpu_custom_call.1} parent=23 // pred_region
          %s156 = sand.u32 %s14, 1
          %s157 = scalar_lea.sflag [#allocation3], %s156
          %s158 = sand.u32 %s66, 1
          %s159 = smul.addr %s158, 64
          %s160 = scalar_lea.vmem [#allocation7], %s159
          %s161 = smul.u32 4, %s14
          %s163 = ssub.s32 1024, 1024
          %164 = vsyncadd %s157, %s163
          %s165 = smul.addr %s161, 2
          %s166 = smul.addr %s165, 128
          %s167 = scalar_lea.hbm %s2, %s166
          %s168 = sshll.u32 %s160, 4
          %s169 = int_to_ptr.vmem [resolvable:$true] %s168
          %174 = dma.hbm_to_vmem [thread:$0]  %s167, 1024, %s169, %s157, 128, 128, 8
        $region28: #{tpu_custom_call.1} parent=23 // pred_fallthru
          _
      $region24: #{tpu_custom_call.1} parent=5 // pred_fallthru
        _
      %p175 = scmp.le.s32.totalorder 1, %s14
      %p176 = scmp.lt.s32.totalorder %s14, 3
      %p177 = pnand %p175, %p176
      %p178 = pneg %p177
      // Predicated region
      $region29: #{tpu_custom_call.1} parent=5 // pred_check
        _
      $region30: #{tpu_custom_call.1} parent=5 // pred_check_branch
        %180 = sbr.rel (%p177) target = $region32
      $region31: #{tpu_custom_call.1} parent=5 // pred_region
        %s181 = ssub.s32 %s14, 1
        // Predicated region
        $region33: #{tpu_custom_call.1} parent=31 // pred_check
          %p182 = pneg %p35
        $region34: #{tpu_custom_call.1} parent=31 // pred_check_branch
          %184 = sbr.rel (%p182) target = $region36
        $region35: #{tpu_custom_call.1} parent=31 // pred_region
          %185 = dma.done [#allocation3], 256
        $region36: #{tpu_custom_call.1} parent=31 // pred_fallthru
          _
        // Predicated region
        $region37: #{tpu_custom_call.1} parent=31 // pred_check
          %p186 = pneg %p56
        $region38: #{tpu_custom_call.1} parent=31 // pred_check_branch
          %188 = sbr.rel (%p186) target = $region40
        $region39: #{tpu_custom_call.1} parent=31 // pred_region
          %189 = dma.done [#allocation6], 256
        $region40: #{tpu_custom_call.1} parent=31 // pred_fallthru
          _
        %s190 = sand.u32 %s19, 1
        %s191 = scalar_lea.sflag [#allocation3], %s190
        %s192 = sand.u32 %s69, 1
        %s193 = smul.addr %s192, 64
        %s194 = scalar_lea.vmem [#allocation7], %s193
        // Predicated region
        $region41: #{tpu_custom_call.1} parent=31 // pred_check
          %p195 = pneg %p82
        $region42: #{tpu_custom_call.1} parent=31 // pred_check_branch
          %197 = sbr.rel (%p195) target = $region44
        $region43: #{tpu_custom_call.1} parent=31 // pred_region
          %198 = dma.done %s191, 1024
        $region44: #{tpu_custom_call.1} parent=31 // pred_fallthru
          _
        %p199 = pneg %p35
        %p200 = pneg %p32
        %p201 = pneg %p56
        %p202 = pneg %p53
        %s203 = sand.u32 %s19, 1
        %s204 = scalar_lea.sflag [#allocation3], %s203
        %s205 = sand.u32 %s69, 1
        %s206 = smul.addr %s205, 64
        %s207 = scalar_lea.vmem [#allocation7], %s206
        %p208 = pneg %p82
        %p209 = pneg %p79
        %p210 = pneg %p108
        %p211 = pneg %p105
        %s212 = sand.u32 %s95, 1
        %s213 = scalar_lea.sflag [#allocation4], %s212
        %s214 = sand.u32 %s95, 1
        %s215 = smul.addr %s214, 64
        %s216 = scalar_lea.vmem [#allocation8], %s215
        %s217 = smul.u32 4, %s19
        %s218 = smul.u32 4, %s19
        %v219 = vld [vmem:[#allocation2] sm:$0xff]
        %v220 = vld [vmem:[#allocation2 + $0x8] sm:$0xff]
        %v221 = vld [vmem:[#allocation5] sm:$0xff]
        %v222 = vld [vmem:[#allocation5 + $0x8] sm:$0xff]
        %v223 = vld [vmem:[%s194] sm:$0xff]
        %v224 = vld [vmem:[%s194 + $0x8] sm:$0xff]
        %vm225 = vcmask 130048
        %v227 = vsel %vm225, %v219, 0
        %v230 = vsel %vm225, %v220, 0
        %232 = vmatprep.subr.mxu0 0.0
        %233 = vmatpush1.msra.mxu0 %v223
        %234 = vmatprep.subr.mxu0 0.0
        %235 = vmatpush1.msra.mxu0 %v224
        %236 = vmatprep.subr.mxu0 0.0
        %237 = vmatpush1.msra.mxu0 0.0
        %238 = vmatprep.subr.mxu0 0.0
        %239 = vmatpush1.msra.mxu0 0.0
        %240 = vmatprep.subr.mxu0 0.0
        %241 = vmatpush1.msra.mxu0 0.0
        %242 = vmatprep.subr.mxu0 0.0
        %243 = vmatpush1.msra.mxu0 0.0
        %244 = vmatprep.subr.mxu0 0.0
        %245 = vmatpush1.msra.mxu0 0.0
        %246 = vmatprep.subr.mxu0 0.0
        %247 = vmatpush1.msra.mxu0 0.0
        %248 = vmatprep.subr.mxu0 0.0
        %249 = vmatpush1.msra.mxu0 0.0
        %250 = vmatprep.subr.mxu0 0.0
        %251 = vmatpush1.msra.mxu0 0.0
        %252 = vmatprep.subr.mxu0 0.0
        %253 = vmatpush1.msra.mxu0 0.0
        %254 = vmatprep.subr.mxu0 0.0
        %255 = vmatpush1.msra.mxu0 0.0
        %256 = vmatprep.subr.mxu0 0.0
        %257 = vmatpush1.msra.mxu0 0.0
        %258 = vmatprep.subr.mxu0 0.0
        %259 = vmatpush1.msra.mxu0 0.0
        %260 = vmatprep.subr.mxu0 0.0
        %261 = vmatpush1.msra.mxu0 0.0
        %262 = vmatprep.subr.mxu0 0.0
        %263 = vmatpush1.msra.mxu0 0.0
        %264 = vmatprep.subr.mxu0 0.0
        %265 = vmatpush1.msra.mxu0 0.0
        %266 = vmatprep.subr.mxu0 0.0
        %267 = vmatpush1.msra.mxu0 0.0
        %268 = vmatprep.subr.mxu0 0.0
        %269 = vmatpush1.msra.mxu0 0.0
        %270 = vmatprep.subr.mxu0 0.0
        %271 = vmatpush1.msra.mxu0 0.0
        %272 = vmatprep.subr.mxu0 0.0
        %273 = vmatpush1.msra.mxu0 0.0
        %274 = vmatprep.subr.mxu0 0.0
        %275 = vmatpush1.msra.mxu0 0.0
        %276 = vmatprep.subr.mxu0 0.0
        %277 = vmatpush1.msra.mxu0 0.0
        %278 = vmatprep.subr.mxu0 0.0
        %279 = vmatpush1.msra.mxu0 0.0
        %280 = vmatprep.subr.mxu0 0.0
        %281 = vmatpush1.msra.mxu0 0.0
        %282 = vmatprep.subr.mxu0 0.0
        %283 = vmatpush1.msra.mxu0 0.0
        %284 = vmatprep.subr.mxu0 0.0
        %285 = vmatpush1.msra.mxu0 0.0
        %286 = vmatprep.subr.mxu0 0.0
        %287 = vmatpush1.msra.mxu0 0.0
        %288 = vmatprep.subr.mxu0 0.0
        %289 = vmatpush1.msra.mxu0 0.0
        %290 = vmatprep.subr.mxu0 0.0
        %291 = vmatpush1.msra.mxu0 0.0
        %292 = vmatprep.subr.mxu0 0.0
        %293 = vmatpush1.msra.mxu0 0.0
        %294 = vmatprep.subr.mxu0 0.0
        %295 = vmatpush1.msra.mxu0 0.0
        %296 = vmatprep.mubr.f32.mxu0 0.0
        %297 = vmatmul.mubr.f32.gmra.mrb[0].mxu0 %v227
        %v298 = vpop.f32.mrb[0].mxu0
        %v299 = vadd.f32 0.0, %v298
        %v300 = vpop.f32.mrb[0].mxu0
        %301 = vmatprep.mubr.f32.mxu0 0.0
        %302 = vmatmul.mubr.f32.gmra.mrb[0].mxu0 %v230
        %v303 = vpop.f32.mrb[0].mxu0
        %v304 = vadd.f32 0.0, %v303
        %v305 = vpop.f32.mrb[0].mxu0
        %306 = vdwg.mxu0
        %v308 = vsel %vm225, %v299, 0
        %v311 = vsel %vm225, %v304, 0
        %313 = vmatprep.subr.mxu0 0.0
        %314 = vmatpush1.msra.mxu0 %v221
        %315 = vmatprep.subr.mxu0 0.0
        %316 = vmatpush1.msra.mxu0 %v222
        %317 = vmatprep.subr.mxu0 0.0
        %318 = vmatpush1.msra.mxu0 0.0
        %319 = vmatprep.subr.mxu0 0.0
        %320 = vmatpush1.msra.mxu0 0.0
        %321 = vmatprep.subr.mxu0 0.0
        %322 = vmatpush1.msra.mxu0 0.0
        %323 = vmatprep.subr.mxu0 0.0
        %324 = vmatpush1.msra.mxu0 0.0
        %325 = vmatprep.subr.mxu0 0.0
        %326 = vmatpush1.msra.mxu0 0.0
        %327 = vmatprep.subr.mxu0 0.0
        %328 = vmatpush1.msra.mxu0 0.0
        %329 = vmatprep.subr.mxu0 0.0
        %330 = vmatpush1.msra.mxu0 0.0
        %331 = vmatprep.subr.mxu0 0.0
        %332 = vmatpush1.msra.mxu0 0.0
        %333 = vmatprep.subr.mxu0 0.0
        %334 = vmatpush1.msra.mxu0 0.0
        %335 = vmatprep.subr.mxu0 0.0
        %336 = vmatpush1.msra.mxu0 0.0
        %337 = vmatprep.subr.mxu0 0.0
        %338 = vmatpush1.msra.mxu0 0.0
        %339 = vmatprep.subr.mxu0 0.0
        %340 = vmatpush1.msra.mxu0 0.0
        %341 = vmatprep.subr.mxu0 0.0
        %342 = vmatpush1.msra.mxu0 0.0
        %343 = vmatprep.subr.mxu0 0.0
        %344 = vmatpush1.msra.mxu0 0.0
        %345 = vmatprep.subr.mxu0 0.0
        %346 = vmatpush1.msra.mxu0 0.0
        %347 = vmatprep.subr.mxu0 0.0
        %348 = vmatpush1.msra.mxu0 0.0
        %349 = vmatprep.subr.mxu0 0.0
        %350 = vmatpush1.msra.mxu0 0.0
        %351 = vmatprep.subr.mxu0 0.0
        %352 = vmatpush1.msra.mxu0 0.0
        %353 = vmatprep.subr.mxu0 0.0
        %354 = vmatpush1.msra.mxu0 0.0
        %355 = vmatprep.subr.mxu0 0.0
        %356 = vmatpush1.msra.mxu0 0.0
        %357 = vmatprep.subr.mxu0 0.0
        %358 = vmatpush1.msra.mxu0 0.0
        %359 = vmatprep.subr.mxu0 0.0
        %360 = vmatpush1.msra.mxu0 0.0
        %361 = vmatprep.subr.mxu0 0.0
        %362 = vmatpush1.msra.mxu0 0.0
        %363 = vmatprep.subr.mxu0 0.0
        %364 = vmatpush1.msra.mxu0 0.0
        %365 = vmatprep.subr.mxu0 0.0
        %366 = vmatpush1.msra.mxu0 0.0
        %367 = vmatprep.subr.mxu0 0.0
        %368 = vmatpush1.msra.mxu0 0.0
        %369 = vmatprep.subr.mxu0 0.0
        %370 = vmatpush1.msra.mxu0 0.0
        %371 = vmatprep.subr.mxu0 0.0
        %372 = vmatpush1.msra.mxu0 0.0
        %373 = vmatprep.subr.mxu0 0.0
        %374 = vmatpush1.msra.mxu0 0.0
        %375 = vmatprep.subr.mxu0 0.0
        %376 = vmatpush1.msra.mxu0 0.0
        %377 = vmatprep.mubr.f32.mxu0 0.0
        %378 = vmatmul.mubr.f32.gmra.mrb[0].mxu0 %v308
        %v379 = vpop.f32.mrb[0].mxu0
        %v380 = vadd.f32 0.0, %v379
        %v381 = vpop.f32.mrb[0].mxu0
        %382 = vmatprep.mubr.f32.mxu0 0.0
        %383 = vmatmul.mubr.f32.gmra.mrb[0].mxu0 %v311
        %v384 = vpop.f32.mrb[0].mxu0
        %v385 = vadd.f32 0.0, %v384
        %v386 = vpop.f32.mrb[0].mxu0
        %387 = vdwg.mxu0
        %388 = vst.msk [vmem:[%s216] sm:$0xff] %vm225, %v380
        %389 = vst.msk [vmem:[%s216 + $0x8] sm:$0xff] %vm225, %v385
        %s390 = scalar_lea.vmem %s194, 16 [#allocation7]
        %v391 = vld [vmem:[%s390] sm:$0xff]
        %v392 = vld [vmem:[%s390 + $0x8] sm:$0xff]
        %393 = vmatprep.subr.mxu0 0.0
        %394 = vmatpush1.msra.mxu0 %v391
        %395 = vmatprep.subr.mxu0 0.0
        %396 = vmatpush1.msra.mxu0 %v392
        %397 = vmatprep.subr.mxu0 0.0
        %398 = vmatpush1.msra.mxu0 0.0
        %399 = vmatprep.subr.mxu0 0.0
        %400 = vmatpush1.msra.mxu0 0.0
        %401 = vmatprep.subr.mxu0 0.0
        %402 = vmatpush1.msra.mxu0 0.0
        %403 = vmatprep.subr.mxu0 0.0
        %404 = vmatpush1.msra.mxu0 0.0
        %405 = vmatprep.subr.mxu0 0.0
        %406 = vmatpush1.msra.mxu0 0.0
        %407 = vmatprep.subr.mxu0 0.0
        %408 = vmatpush1.msra.mxu0 0.0
        %409 = vmatprep.subr.mxu0 0.0
        %410 = vmatpush1.msra.mxu0 0.0
        %411 = vmatprep.subr.mxu0 0.0
        %412 = vmatpush1.msra.mxu0 0.0
        %413 = vmatprep.subr.mxu0 0.0
        %414 = vmatpush1.msra.mxu0 0.0
        %415 = vmatprep.subr.mxu0 0.0
        %416 = vmatpush1.msra.mxu0 0.0
        %417 = vmatprep.subr.mxu0 0.0
        %418 = vmatpush1.msra.mxu0 0.0
        %419 = vmatprep.subr.mxu0 0.0
        %420 = vmatpush1.msra.mxu0 0.0
        %421 = vmatprep.subr.mxu0 0.0
        %422 = vmatpush1.msra.mxu0 0.0
        %423 = vmatprep.subr.mxu0 0.0
        %424 = vmatpush1.msra.mxu0 0.0
        %425 = vmatprep.subr.mxu0 0.0
        %426 = vmatpush1.msra.mxu0 0.0
        %427 = vmatprep.subr.mxu0 0.0
        %428 = vmatpush1.msra.mxu0 0.0
        %429 = vmatprep.subr.mxu0 0.0
        %430 = vmatpush1.msra.mxu0 0.0
        %431 = vmatprep.subr.mxu0 0.0
        %432 = vmatpush1.msra.mxu0 0.0
        %433 = vmatprep.subr.mxu0 0.0
        %434 = vmatpush1.msra.mxu0 0.0
        %435 = vmatprep.subr.mxu0 0.0
        %436 = vmatpush1.msra.mxu0 0.0
        %437 = vmatprep.subr.mxu0 0.0
        %438 = vmatpush1.msra.mxu0 0.0
        %439 = vmatprep.subr.mxu0 0.0
        %440 = vmatpush1.msra.mxu0 0.0
        %441 = vmatprep.subr.mxu0 0.0
        %442 = vmatpush1.msra.mxu0 0.0
        %443 = vmatprep.subr.mxu0 0.0
        %444 = vmatpush1.msra.mxu0 0.0
        %445 = vmatprep.subr.mxu0 0.0
        %446 = vmatpush1.msra.mxu0 0.0
        %447 = vmatprep.subr.mxu0 0.0
        %448 = vmatpush1.msra.mxu0 0.0
        %449 = vmatprep.subr.mxu0 0.0
        %450 = vmatpush1.msra.mxu0 0.0
        %451 = vmatprep.subr.mxu0 0.0
        %452 = vmatpush1.msra.mxu0 0.0
        %453 = vmatprep.subr.mxu0 0.0
        %454 = vmatpush1.msra.mxu0 0.0
        %455 = vmatprep.subr.mxu0 0.0
        %456 = vmatpush1.msra.mxu0 0.0
        %457 = vmatprep.mubr.f32.mxu0 0.0
        %458 = vmatmul.mubr.f32.gmra.mrb[0].mxu0 %v227
        %v459 = vpop.f32.mrb[0].mxu0
        %v460 = vadd.f32 0.0, %v459
        %v461 = vpop.f32.mrb[0].mxu0
        %462 = vmatprep.mubr.f32.mxu0 0.0
        %463 = vmatmul.mubr.f32.gmra.mrb[0].mxu0 %v230
        %v464 = vpop.f32.mrb[0].mxu0
        %v465 = vadd.f32 0.0, %v464
        %v466 = vpop.f32.mrb[0].mxu0
        %467 = vdwg.mxu0
        %v469 = vsel %vm225, %v460, 0
        %v472 = vsel %vm225, %v465, 0
        %474 = vmatprep.subr.mxu0 0.0
        %475 = vmatpush1.msra.mxu0 %v221
        %476 = vmatprep.subr.mxu0 0.0
        %477 = vmatpush1.msra.mxu0 %v222
        %478 = vmatprep.subr.mxu0 0.0
        %479 = vmatpush1.msra.mxu0 0.0
        %480 = vmatprep.subr.mxu0 0.0
        %481 = vmatpush1.msra.mxu0 0.0
        %482 = vmatprep.subr.mxu0 0.0
        %483 = vmatpush1.msra.mxu0 0.0
        %484 = vmatprep.subr.mxu0 0.0
        %485 = vmatpush1.msra.mxu0 0.0
        %486 = vmatprep.subr.mxu0 0.0
        %487 = vmatpush1.msra.mxu0 0.0
        %488 = vmatprep.subr.mxu0 0.0
        %489 = vmatpush1.msra.mxu0 0.0
        %490 = vmatprep.subr.mxu0 0.0
        %491 = vmatpush1.msra.mxu0 0.0
        %492 = vmatprep.subr.mxu0 0.0
        %493 = vmatpush1.msra.mxu0 0.0
        %494 = vmatprep.subr.mxu0 0.0
        %495 = vmatpush1.msra.mxu0 0.0
        %496 = vmatprep.subr.mxu0 0.0
        %497 = vmatpush1.msra.mxu0 0.0
        %498 = vmatprep.subr.mxu0 0.0
        %499 = vmatpush1.msra.mxu0 0.0
        %500 = vmatprep.subr.mxu0 0.0
        %501 = vmatpush1.msra.mxu0 0.0
        %502 = vmatprep.subr.mxu0 0.0
        %503 = vmatpush1.msra.mxu0 0.0
        %504 = vmatprep.subr.mxu0 0.0
        %505 = vmatpush1.msra.mxu0 0.0
        %506 = vmatprep.subr.mxu0 0.0
        %507 = vmatpush1.msra.mxu0 0.0
        %508 = vmatprep.subr.mxu0 0.0
        %509 = vmatpush1.msra.mxu0 0.0
        %510 = vmatprep.subr.mxu0 0.0
        %511 = vmatpush1.msra.mxu0 0.0
        %512 = vmatprep.subr.mxu0 0.0
        %513 = vmatpush1.msra.mxu0 0.0
        %514 = vmatprep.subr.mxu0 0.0
        %515 = vmatpush1.msra.mxu0 0.0
        %516 = vmatprep.subr.mxu0 0.0
        %517 = vmatpush1.msra.mxu0 0.0
        %518 = vmatprep.subr.mxu0 0.0
        %519 = vmatpush1.msra.mxu0 0.0
        %520 = vmatprep.subr.mxu0 0.0
        %521 = vmatpush1.msra.mxu0 0.0
        %522 = vmatprep.subr.mxu0 0.0
        %523 = vmatpush1.msra.mxu0 0.0
        %524 = vmatprep.subr.mxu0 0.0
        %525 = vmatpush1.msra.mxu0 0.0
        %526 = vmatprep.subr.mxu0 0.0
        %527 = vmatpush1.msra.mxu0 0.0
        %528 = vmatprep.subr.mxu0 0.0
        %529 = vmatpush1.msra.mxu0 0.0
        %530 = vmatprep.subr.mxu0 0.0
        %531 = vmatpush1.msra.mxu0 0.0
        %532 = vmatprep.subr.mxu0 0.0
        %533 = vmatpush1.msra.mxu0 0.0
        %534 = vmatprep.subr.mxu0 0.0
        %535 = vmatpush1.msra.mxu0 0.0
        %536 = vmatprep.subr.mxu0 0.0
        %537 = vmatpush1.msra.mxu0 0.0
        %538 = vmatprep.mubr.f32.mxu0 0.0
        %539 = vmatmul.mubr.f32.gmra.mrb[0].mxu0 %v469
        %v540 = vpop.f32.mrb[0].mxu0
        %v541 = vadd.f32 0.0, %v540
        %v542 = vpop.f32.mrb[0].mxu0
        %543 = vmatprep.mubr.f32.mxu0 0.0
        %544 = vmatmul.mubr.f32.gmra.mrb[0].mxu0 %v472
        %v545 = vpop.f32.mrb[0].mxu0
        %v546 = vadd.f32 0.0, %v545
        %v547 = vpop.f32.mrb[0].mxu0
        %548 = vdwg.mxu0
        %s549 = scalar_lea.vmem %s216, 16 [#allocation8]
        %550 = vst.msk [vmem:[%s549] sm:$0xff] %vm225, %v541
        %551 = vst.msk [vmem:[%s549 + $0x8] sm:$0xff] %vm225, %v546
        %s552 = scalar_lea.vmem %s194, 32 [#allocation7]
        %v553 = vld [vmem:[%s552] sm:$0xff]
        %v554 = vld [vmem:[%s552 + $0x8] sm:$0xff]
        %555 = vmatprep.subr.mxu0 0.0
        %556 = vmatpush1.msra.mxu0 %v553
        %557 = vmatprep.subr.mxu0 0.0
        %558 = vmatpush1.msra.mxu0 %v554
        %559 = vmatprep.subr.mxu0 0.0
        %560 = vmatpush1.msra.mxu0 0.0
        %561 = vmatprep.subr.mxu0 0.0
        %562 = vmatpush1.msra.mxu0 0.0
        %563 = vmatprep.subr.mxu0 0.0
        %564 = vmatpush1.msra.mxu0 0.0
        %565 = vmatprep.subr.mxu0 0.0
        %566 = vmatpush1.msra.mxu0 0.0
        %567 = vmatprep.subr.mxu0 0.0
        %568 = vmatpush1.msra.mxu0 0.0
        %569 = vmatprep.subr.mxu0 0.0
        %570 = vmatpush1.msra.mxu0 0.0
        %571 = vmatprep.subr.mxu0 0.0
        %572 = vmatpush1.msra.mxu0 0.0
        %573 = vmatprep.subr.mxu0 0.0
        %574 = vmatpush1.msra.mxu0 0.0
        %575 = vmatprep.subr.mxu0 0.0
        %576 = vmatpush1.msra.mxu0 0.0
        %577 = vmatprep.subr.mxu0 0.0
        %578 = vmatpush1.msra.mxu0 0.0
        %579 = vmatprep.subr.mxu0 0.0
        %580 = vmatpush1.msra.mxu0 0.0
        %581 = vmatprep.subr.mxu0 0.0
        %582 = vmatpush1.msra.mxu0 0.0
        %583 = vmatprep.subr.mxu0 0.0
        %584 = vmatpush1.msra.mxu0 0.0
        %585 = vmatprep.subr.mxu0 0.0
        %586 = vmatpush1.msra.mxu0 0.0
        %587 = vmatprep.subr.mxu0 0.0
        %588 = vmatpush1.msra.mxu0 0.0
        %589 = vmatprep.subr.mxu0 0.0
        %590 = vmatpush1.msra.mxu0 0.0
        %591 = vmatprep.subr.mxu0 0.0
        %592 = vmatpush1.msra.mxu0 0.0
        %593 = vmatprep.subr.mxu0 0.0
        %594 = vmatpush1.msra.mxu0 0.0
        %595 = vmatprep.subr.mxu0 0.0
        %596 = vmatpush1.msra.mxu0 0.0
        %597 = vmatprep.subr.mxu0 0.0
        %598 = vmatpush1.msra.mxu0 0.0
        %599 = vmatprep.subr.mxu0 0.0
        %600 = vmatpush1.msra.mxu0 0.0
        %601 = vmatprep.subr.mxu0 0.0
        %602 = vmatpush1.msra.mxu0 0.0
        %603 = vmatprep.subr.mxu0 0.0
        %604 = vmatpush1.msra.mxu0 0.0
        %605 = vmatprep.subr.mxu0 0.0
        %606 = vmatpush1.msra.mxu0 0.0
        %607 = vmatprep.subr.mxu0 0.0
        %608 = vmatpush1.msra.mxu0 0.0
        %609 = vmatprep.subr.mxu0 0.0
        %610 = vmatpush1.msra.mxu0 0.0
        %611 = vmatprep.subr.mxu0 0.0
        %612 = vmatpush1.msra.mxu0 0.0
        %613 = vmatprep.subr.mxu0 0.0
        %614 = vmatpush1.msra.mxu0 0.0
        %615 = vmatprep.subr.mxu0 0.0
        %616 = vmatpush1.msra.mxu0 0.0
        %617 = vmatprep.subr.mxu0 0.0
        %618 = vmatpush1.msra.mxu0 0.0
        %619 = vmatprep.mubr.f32.mxu0 0.0
        %620 = vmatmul.mubr.f32.gmra.mrb[0].mxu0 %v227
        %v621 = vpop.f32.mrb[0].mxu0
        %v622 = vadd.f32 0.0, %v621
        %v623 = vpop.f32.mrb[0].mxu0
        %624 = vmatprep.mubr.f32.mxu0 0.0
        %625 = vmatmul.mubr.f32.gmra.mrb[0].mxu0 %v230
        %v626 = vpop.f32.mrb[0].mxu0
        %v627 = vadd.f32 0.0, %v626
        %v628 = vpop.f32.mrb[0].mxu0
        %629 = vdwg.mxu0
        %v631 = vsel %vm225, %v622, 0
        %v634 = vsel %vm225, %v627, 0
        %636 = vmatprep.subr.mxu0 0.0
        %637 = vmatpush1.msra.mxu0 %v221
        %638 = vmatprep.subr.mxu0 0.0
        %639 = vmatpush1.msra.mxu0 %v222
        %640 = vmatprep.subr.mxu0 0.0
        %641 = vmatpush1.msra.mxu0 0.0
        %642 = vmatprep.subr.mxu0 0.0
        %643 = vmatpush1.msra.mxu0 0.0
        %644 = vmatprep.subr.mxu0 0.0
        %645 = vmatpush1.msra.mxu0 0.0
        %646 = vmatprep.subr.mxu0 0.0
        %647 = vmatpush1.msra.mxu0 0.0
        %648 = vmatprep.subr.mxu0 0.0
        %649 = vmatpush1.msra.mxu0 0.0
        %650 = vmatprep.subr.mxu0 0.0
        %651 = vmatpush1.msra.mxu0 0.0
        %652 = vmatprep.subr.mxu0 0.0
        %653 = vmatpush1.msra.mxu0 0.0
        %654 = vmatprep.subr.mxu0 0.0
        %655 = vmatpush1.msra.mxu0 0.0
        %656 = vmatprep.subr.mxu0 0.0
        %657 = vmatpush1.msra.mxu0 0.0
        %658 = vmatprep.subr.mxu0 0.0
        %659 = vmatpush1.msra.mxu0 0.0
        %660 = vmatprep.subr.mxu0 0.0
        %661 = vmatpush1.msra.mxu0 0.0
        %662 = vmatprep.subr.mxu0 0.0
        %663 = vmatpush1.msra.mxu0 0.0
        %664 = vmatprep.subr.mxu0 0.0
        %665 = vmatpush1.msra.mxu0 0.0
        %666 = vmatprep.subr.mxu0 0.0
        %667 = vmatpush1.msra.mxu0 0.0
        %668 = vmatprep.subr.mxu0 0.0
        %669 = vmatpush1.msra.mxu0 0.0
        %670 = vmatprep.subr.mxu0 0.0
        %671 = vmatpush1.msra.mxu0 0.0
        %672 = vmatprep.subr.mxu0 0.0
        %673 = vmatpush1.msra.mxu0 0.0
        %674 = vmatprep.subr.mxu0 0.0
        %675 = vmatpush1.msra.mxu0 0.0
        %676 = vmatprep.subr.mxu0 0.0
        %677 = vmatpush1.msra.mxu0 0.0
        %678 = vmatprep.subr.mxu0 0.0
        %679 = vmatpush1.msra.mxu0 0.0
        %680 = vmatprep.subr.mxu0 0.0
        %681 = vmatpush1.msra.mxu0 0.0
        %682 = vmatprep.subr.mxu0 0.0
        %683 = vmatpush1.msra.mxu0 0.0
        %684 = vmatprep.subr.mxu0 0.0
        %685 = vmatpush1.msra.mxu0 0.0
        %686 = vmatprep.subr.mxu0 0.0
        %687 = vmatpush1.msra.mxu0 0.0
        %688 = vmatprep.subr.mxu0 0.0
        %689 = vmatpush1.msra.mxu0 0.0
        %690 = vmatprep.subr.mxu0 0.0
        %691 = vmatpush1.msra.mxu0 0.0
        %692 = vmatprep.subr.mxu0 0.0
        %693 = vmatpush1.msra.mxu0 0.0
        %694 = vmatprep.subr.mxu0 0.0
        %695 = vmatpush1.msra.mxu0 0.0
        %696 = vmatprep.subr.mxu0 0.0
        %697 = vmatpush1.msra.mxu0 0.0
        %698 = vmatprep.subr.mxu0 0.0
        %699 = vmatpush1.msra.mxu0 0.0
        %700 = vmatprep.mubr.f32.mxu0 0.0
        %701 = vmatmul.mubr.f32.gmra.mrb[0].mxu0 %v631
        %v702 = vpop.f32.mrb[0].mxu0
        %v703 = vadd.f32 0.0, %v702
        %v704 = vpop.f32.mrb[0].mxu0
        %705 = vmatprep.mubr.f32.mxu0 0.0
        %706 = vmatmul.mubr.f32.gmra.mrb[0].mxu0 %v634
        %v707 = vpop.f32.mrb[0].mxu0
        %v708 = vadd.f32 0.0, %v707
        %v709 = vpop.f32.mrb[0].mxu0
        %710 = vdwg.mxu0
        %s711 = scalar_lea.vmem %s216, 32 [#allocation8]
        %712 = vst.msk [vmem:[%s711] sm:$0xff] %vm225, %v703
        %713 = vst.msk [vmem:[%s711 + $0x8] sm:$0xff] %vm225, %v708
        %s714 = scalar_lea.vmem %s194, 48 [#allocation7]
        %v715 = vld [vmem:[%s714] sm:$0xff]
        %v716 = vld [vmem:[%s714 + $0x8] sm:$0xff]
        %717 = vmatprep.subr.mxu0 0.0
        %718 = vmatpush1.msra.mxu0 %v715
        %719 = vmatprep.subr.mxu0 0.0
        %720 = vmatpush1.msra.mxu0 %v716
        %721 = vmatprep.subr.mxu0 0.0
        %722 = vmatpush1.msra.mxu0 0.0
        %723 = vmatprep.subr.mxu0 0.0
        %724 = vmatpush1.msra.mxu0 0.0
        %725 = vmatprep.subr.mxu0 0.0
        %726 = vmatpush1.msra.mxu0 0.0
        %727 = vmatprep.subr.mxu0 0.0
        %728 = vmatpush1.msra.mxu0 0.0
        %729 = vmatprep.subr.mxu0 0.0
        %730 = vmatpush1.msra.mxu0 0.0
        %731 = vmatprep.subr.mxu0 0.0
        %732 = vmatpush1.msra.mxu0 0.0
        %733 = vmatprep.subr.mxu0 0.0
        %734 = vmatpush1.msra.mxu0 0.0
        %735 = vmatprep.subr.mxu0 0.0
        %736 = vmatpush1.msra.mxu0 0.0
        %737 = vmatprep.subr.mxu0 0.0
        %738 = vmatpush1.msra.mxu0 0.0
        %739 = vmatprep.subr.mxu0 0.0
        %740 = vmatpush1.msra.mxu0 0.0
        %741 = vmatprep.subr.mxu0 0.0
        %742 = vmatpush1.msra.mxu0 0.0
        %743 = vmatprep.subr.mxu0 0.0
        %744 = vmatpush1.msra.mxu0 0.0
        %745 = vmatprep.subr.mxu0 0.0
        %746 = vmatpush1.msra.mxu0 0.0
        %747 = vmatprep.subr.mxu0 0.0
        %748 = vmatpush1.msra.mxu0 0.0
        %749 = vmatprep.subr.mxu0 0.0
        %750 = vmatpush1.msra.mxu0 0.0
        %751 = vmatprep.subr.mxu0 0.0
        %752 = vmatpush1.msra.mxu0 0.0
        %753 = vmatprep.subr.mxu0 0.0
        %754 = vmatpush1.msra.mxu0 0.0
        %755 = vmatprep.subr.mxu0 0.0
        %756 = vmatpush1.msra.mxu0 0.0
        %757 = vmatprep.subr.mxu0 0.0
        %758 = vmatpush1.msra.mxu0 0.0
        %759 = vmatprep.subr.mxu0 0.0
        %760 = vmatpush1.msra.mxu0 0.0
        %761 = vmatprep.subr.mxu0 0.0
        %762 = vmatpush1.msra.mxu0 0.0
        %763 = vmatprep.subr.mxu0 0.0
        %764 = vmatpush1.msra.mxu0 0.0
        %765 = vmatprep.subr.mxu0 0.0
        %766 = vmatpush1.msra.mxu0 0.0
        %767 = vmatprep.subr.mxu0 0.0
        %768 = vmatpush1.msra.mxu0 0.0
        %769 = vmatprep.subr.mxu0 0.0
        %770 = vmatpush1.msra.mxu0 0.0
        %771 = vmatprep.subr.mxu0 0.0
        %772 = vmatpush1.msra.mxu0 0.0
        %773 = vmatprep.subr.mxu0 0.0
        %774 = vmatpush1.msra.mxu0 0.0
        %775 = vmatprep.subr.mxu0 0.0
        %776 = vmatpush1.msra.mxu0 0.0
        %777 = vmatprep.subr.mxu0 0.0
        %778 = vmatpush1.msra.mxu0 0.0
        %779 = vmatprep.subr.mxu0 0.0
        %780 = vmatpush1.msra.mxu0 0.0
        %781 = vmatprep.mubr.f32.mxu0 0.0
        %782 = vmatmul.mubr.f32.gmra.mrb[0].mxu0 %v227
        %v783 = vpop.f32.mrb[0].mxu0
        %v784 = vadd.f32 0.0, %v783
        %v785 = vpop.f32.mrb[0].mxu0
        %786 = vmatprep.mubr.f32.mxu0 0.0
        %787 = vmatmul.mubr.f32.gmra.mrb[0].mxu0 %v230
        %v788 = vpop.f32.mrb[0].mxu0
        %v789 = vadd.f32 0.0, %v788
        %v790 = vpop.f32.mrb[0].mxu0
        %791 = vdwg.mxu0
        %v793 = vsel %vm225, %v784, 0
        %v796 = vsel %vm225, %v789, 0
        %798 = vmatprep.subr.mxu0 0.0
        %799 = vmatpush1.msra.mxu0 %v221
        %800 = vmatprep.subr.mxu0 0.0
        %801 = vmatpush1.msra.mxu0 %v222
        %802 = vmatprep.subr.mxu0 0.0
        %803 = vmatpush1.msra.mxu0 0.0
        %804 = vmatprep.subr.mxu0 0.0
        %805 = vmatpush1.msra.mxu0 0.0
        %806 = vmatprep.subr.mxu0 0.0
        %807 = vmatpush1.msra.mxu0 0.0
        %808 = vmatprep.subr.mxu0 0.0
        %809 = vmatpush1.msra.mxu0 0.0
        %810 = vmatprep.subr.mxu0 0.0
        %811 = vmatpush1.msra.mxu0 0.0
        %812 = vmatprep.subr.mxu0 0.0
        %813 = vmatpush1.msra.mxu0 0.0
        %814 = vmatprep.subr.mxu0 0.0
        %815 = vmatpush1.msra.mxu0 0.0
        %816 = vmatprep.subr.mxu0 0.0
        %817 = vmatpush1.msra.mxu0 0.0
        %818 = vmatprep.subr.mxu0 0.0
        %819 = vmatpush1.msra.mxu0 0.0
        %820 = vmatprep.subr.mxu0 0.0
        %821 = vmatpush1.msra.mxu0 0.0
        %822 = vmatprep.subr.mxu0 0.0
        %823 = vmatpush1.msra.mxu0 0.0
        %824 = vmatprep.subr.mxu0 0.0
        %825 = vmatpush1.msra.mxu0 0.0
        %826 = vmatprep.subr.mxu0 0.0
        %827 = vmatpush1.msra.mxu0 0.0
        %828 = vmatprep.subr.mxu0 0.0
        %829 = vmatpush1.msra.mxu0 0.0
        %830 = vmatprep.subr.mxu0 0.0
        %831 = vmatpush1.msra.mxu0 0.0
        %832 = vmatprep.subr.mxu0 0.0
        %833 = vmatpush1.msra.mxu0 0.0
        %834 = vmatprep.subr.mxu0 0.0
        %835 = vmatpush1.msra.mxu0 0.0
        %836 = vmatprep.subr.mxu0 0.0
        %837 = vmatpush1.msra.mxu0 0.0
        %838 = vmatprep.subr.mxu0 0.0
        %839 = vmatpush1.msra.mxu0 0.0
        %840 = vmatprep.subr.mxu0 0.0
        %841 = vmatpush1.msra.mxu0 0.0
        %842 = vmatprep.subr.mxu0 0.0
        %843 = vmatpush1.msra.mxu0 0.0
        %844 = vmatprep.subr.mxu0 0.0
        %845 = vmatpush1.msra.mxu0 0.0
        %846 = vmatprep.subr.mxu0 0.0
        %847 = vmatpush1.msra.mxu0 0.0
        %848 = vmatprep.subr.mxu0 0.0
        %849 = vmatpush1.msra.mxu0 0.0
        %850 = vmatprep.subr.mxu0 0.0
        %851 = vmatpush1.msra.mxu0 0.0
        %852 = vmatprep.subr.mxu0 0.0
        %853 = vmatpush1.msra.mxu0 0.0
        %854 = vmatprep.subr.mxu0 0.0
        %855 = vmatpush1.msra.mxu0 0.0
        %856 = vmatprep.subr.mxu0 0.0
        %857 = vmatpush1.msra.mxu0 0.0
        %858 = vmatprep.subr.mxu0 0.0
        %859 = vmatpush1.msra.mxu0 0.0
        %860 = vmatprep.subr.mxu0 0.0
        %861 = vmatpush1.msra.mxu0 0.0
        %862 = vmatprep.mubr.f32.mxu0 0.0
        %863 = vmatmul.mubr.f32.gmra.mrb[0].mxu0 %v793
        %v864 = vpop.f32.mrb[0].mxu0
        %v865 = vadd.f32 0.0, %v864
        %v866 = vpop.f32.mrb[0].mxu0
        %867 = vmatprep.mubr.f32.mxu0 0.0
        %868 = vmatmul.mubr.f32.gmra.mrb[0].mxu0 %v796
        %v869 = vpop.f32.mrb[0].mxu0
        %v870 = vadd.f32 0.0, %v869
        %v871 = vpop.f32.mrb[0].mxu0
        %872 = vdwg.mxu0
        %s873 = scalar_lea.vmem %s216, 48 [#allocation8]
        %874 = vst.msk [vmem:[%s873] sm:$0xff] %vm225, %v865
        %875 = vst.msk [vmem:[%s873 + $0x8] sm:$0xff] %vm225, %v870
        %s876 = sand.u32 %s95, 1
        %s877 = scalar_lea.sflag [#allocation4], %s876
        %s878 = sand.u32 %s95, 1
        %s879 = smul.addr %s878, 64
        %s880 = scalar_lea.vmem [#allocation8], %s879
        // Predicated region
        $region45: #{tpu_custom_call.1} parent=31 // pred_check
          %p881 = pneg %p105
        $region46: #{tpu_custom_call.1} parent=31 // pred_check_branch
          %883 = sbr.rel (%p881) target = $region48
        $region47: #{tpu_custom_call.1} parent=31 // pred_region
          %s884 = smul.u32 4, %s19
          %s886 = ssub.s32 1024, 1024
          %887 = vsyncadd %s877, %s886
          %s888 = smul.addr %s884, 2
          %s889 = smul.addr %s888, 128
          %s890 = scalar_lea.hbm %s3, %s889
          %s891 = sshll.u32 %s880, 4
          %s892 = int_to_ptr.vmem [resolvable:$true] %s891
          %897 = dma.vmem_to_hbm [thread:$0]  %s892, 1024, %s890, %s877, 128, 128, 8
        $region48: #{tpu_custom_call.1} parent=31 // pred_fallthru
          _
      $region32: #{tpu_custom_call.1} parent=5 // pred_fallthru
        _
      %p898 = scmp.le.s32.totalorder 2, %s14
      // Predicated region
      $region49: #{tpu_custom_call.1} parent=5 // pred_check
        %p899 = pneg %p898
      $region50: #{tpu_custom_call.1} parent=5 // pred_check_branch
        %901 = sbr.rel (%p899) target = $region52
      $region51: #{tpu_custom_call.1} parent=5 // pred_region
        %s902 = ssub.s32 %s14, 2
        // Predicated region
        $region53: #{tpu_custom_call.1} parent=51 // pred_check
          %p903 = pneg %p111
        $region54: #{tpu_custom_call.1} parent=51 // pred_check_branch
          %905 = sbr.rel (%p903) target = $region56
        $region55: #{tpu_custom_call.1} parent=51 // pred_region
          %s906 = sand.u32 %s96, 1
          %s907 = scalar_lea.sflag [#allocation4], %s906
          %s908 = sand.u32 %s96, 1
          %s909 = smul.addr %s908, 64
          %s910 = scalar_lea.vmem [#allocation8], %s909
          %911 = dma.done %s907, 1024
        $region56: #{tpu_custom_call.1} parent=51 // pred_fallthru
          _
      $region52: #{tpu_custom_call.1} parent=5 // pred_fallthru
        _
    $region6: #{tpu_custom_call.1} parent=1 // loop_footer
      %s18 = sadd.s32 1, %s14
    $region7: #{tpu_custom_call.1} parent=1 // loop_footer_branch
      %13 = sbr.rel target = $region3
    $region8: #{tpu_custom_call.1} parent=1 // loop_exit
      _
    %912 = vsyncpa [#allocation3], 1
    %s913 = scalar_lea.sflag [#allocation3], 1
    %914 = vsyncpa %s913, 1
    %915 = vsyncpa [#allocation6], 1
    %916 = vsyncpa [#allocation4], 1
    %s917 = scalar_lea.sflag [#allocation4], 1
    %918 = vsyncpa %s917, 1

</llo_original>
